<compile_context>
chip_gen: v7x
topology: tpu7x:2x2x1
jax: 0.10.0
libtpu: 0.0.40
codegen_flags: <defaults>
</compile_context>

<pallas_src>
import functools

import jax
import jax.numpy as jnp
from jax.experimental import pallas as pl
from jax.experimental.pallas import tpu as pltpu


def _round_up(x, m):
    return ((x + m - 1) // m) * m


def _clip_loss_kernel(scale_ref, img_ref, txt_ref, loss_ref, l_c_ref, acc_ref,
                      *, n, n_pad, tm):
    i = pl.program_id(0)
    last = pl.num_programs(0) - 1
    padded = n_pad > n                       # static python bool

    @pl.when(i == 0)
    def _init():
        l_c_ref[...] = jnp.zeros_like(l_c_ref)
        acc_ref[0] = jnp.float32(0.0)        # sum over valid rows of (lse_row - diag)
        acc_ref[1] = jnp.float32(0.0)        # sum over valid rows of diag
        acc_ref[2] = jnp.float32(-1e30)      # running global max of the logits

    scale = scale_ref[0]

    # Fold logit_scale into the image tile (O(TM*D) mults), bf16 MXU operands.
    img_bf16 = (img_ref[...].astype(jnp.float32) * scale).astype(jnp.bfloat16)

    # logits tile = (scale * img) @ text.T : contract the last dims directly
    # (no explicit transpose of the resident text block), f32 MXU accumulate.
    logits = jax.lax.dot_general(
        img_bf16, txt_ref[...],
        dimension_numbers=(((1,), (1,)), ((), ())),
        preferred_element_type=jnp.float32)                    # [tm, n_pad]

    # Diagonal ("correct class") logits straight from the feature tiles; the
    # matching text rows are sliced out of the resident block (no extra DMA).
    row0 = pl.multiple_of(i * tm, tm)
    txt_tile = txt_ref[pl.ds(row0, tm), :]                     # [tm, d]
    diag = jnp.sum(
        img_bf16.astype(jnp.float32) * txt_tile.astype(jnp.float32),
        axis=-1, keepdims=True)                                # [tm, 1]

    if padded:
        # Padded text columns (zero rows -> exact-zero logits) must not enter
        # the softmax: one full-width mask pass, compiled only when padded.
        col_ids = jax.lax.broadcasted_iota(jnp.int32, (1, n_pad), 1)
        logits = jnp.where(col_ids < n, logits, jnp.float32(-1e30))

    # Single numerically-stable shift shared by both CE directions: running
    # global max of all logits seen so far (safe for arbitrary feature norms).
    m_old = acc_ref[2]
    m_new = jnp.maximum(m_old, jnp.max(logits))
    acc_ref[2] = m_new

    p = jnp.exp(logits - m_new)                                # one EUP pass

    # ---- image -> text direction (row-wise CE): finished per tile ----
    row_sum = jnp.sum(p, axis=-1, keepdims=True)               # [tm, 1]
    lse_r = m_new + jnp.log(row_sum)
    if padded:
        row_ids = i * tm + jax.lax.broadcasted_iota(jnp.int32, (tm, 1), 0)
        rv = (row_ids < n).astype(jnp.float32)                 # [tm, 1] (cheap)
        acc_ref[0] = acc_ref[0] + jnp.sum((lse_r - diag) * rv)
        acc_ref[1] = acc_ref[1] + jnp.sum(diag * rv)
    else:
        acc_ref[0] = acc_ref[0] + jnp.sum(lse_r - diag)
        acc_ref[1] = acc_ref[1] + jnp.sum(diag)

    # ---- text -> image direction (column-wise CE): online accumulation ----
    # Rescale the running column sums only when the global max actually moved
    # (scalar correction factor; no [1, N] exp / temp, usually skipped).
    @pl.when(m_new > m_old)
    def _rescale():
        l_c_ref[...] = l_c_ref[...] * jnp.exp(m_old - m_new)

    if padded:
        # Padded image rows (exact-zero logits) only exist in the last tile,
        # so the row mask for the column sums is paid exactly once.
        @pl.when(i != last)
        def _acc_cols():
            l_c_ref[...] = l_c_ref[...] + jnp.sum(p, axis=0, keepdims=True)

        @pl.when(i == last)
        def _acc_cols_masked():
            row_ids = i * tm + jax.lax.broadcasted_iota(jnp.int32, (tm, 1), 0)
            p_m = jnp.where(row_ids < n, p, jnp.float32(0.0))
            l_c_ref[...] = l_c_ref[...] + jnp.sum(p_m, axis=0, keepdims=True)
    else:
        l_c_ref[...] = l_c_ref[...] + jnp.sum(p, axis=0, keepdims=True)

    @pl.when(i == last)
    def _finalize():
        m_fin = acc_ref[2]
        l_c = l_c_ref[...]
        if padded:
            col_ids = jax.lax.broadcasted_iota(jnp.int32, (1, n_pad), 1)
            cv = (col_ids < n).astype(jnp.float32)
            lse_c = m_fin + jnp.log(l_c + (1.0 - cv))          # avoid log(0)
            sum_lse_c = jnp.sum(lse_c * cv)
        else:
            lse_c = m_fin + jnp.log(l_c)
            sum_lse_c = jnp.sum(lse_c)
        # total = sum(lse_rows) + sum(lse_cols) - 2 * sum(diag)
        total = acc_ref[0] + (sum_lse_c - acc_ref[1])
        loss_ref[0, 0] = total * (0.5 / n)


def clip_loss(image_features, text_features, logit_scale, *, tm=None):
    n, d = image_features.shape
    assert text_features.shape == (n, d)

    # Physical VMEM (sizes the tiles and the compiler VMEM limit); be
    # conservative if the query is unavailable.
    try:
        vmem_phys = int(getattr(pltpu.get_tpu_info(), "vmem_capacity_bytes"))
    except Exception:
        vmem_phys = 64 << 20

    if tm is None:
        if n >= 2048 and vmem_phys >= (96 << 20):
            tm = 512        # v5e/v6e (128 MiB VMEM): halve the grid steps
        elif n >= 1024:
            tm = 256        # v7x (64 MiB): keep f32 [TM, N] temporaries small
        else:
            tm = _round_up(n, 8)
    tm = _round_up(max(tm, 8), 8)
    n_pad = _round_up(n, tm)
    n_tiles = n_pad // tm

    # bf16 features: full MXU rate and half the HBM->VMEM DMA bytes.
    img = image_features.astype(jnp.bfloat16)
    txt = text_features.astype(jnp.bfloat16)
    if n_pad != n:
        pad = ((0, n_pad - n), (0, 0))
        img = jnp.pad(img, pad)
        txt = jnp.pad(txt, pad)

    scale = jnp.asarray(logit_scale, jnp.float32).reshape(1)

    kernel = functools.partial(_clip_loss_kernel, n=n, n_pad=n_pad, tm=tm)

    # Resident text block: constant index_map -> never re-fetched, so single-
    # buffer it (halves the largest VMEM consumer). Fallback for older jax.
    try:
        txt_spec = pl.BlockSpec((n_pad, d), lambda i: (0, 0),
                                pipeline_mode=pl.Buffered(1))
    except TypeError:
        txt_spec = pl.BlockSpec((n_pad, d), lambda i: (0, 0))

    # VMEM budget from actual buffer sizes, capped below physical VMEM so the
    # compiler keeps headroom for its own temporaries / semaphores.
    budget = (n_pad * d * 2                 # resident text (single buffer)
              + 2 * tm * d * 2              # image tile (double buffered)
              + 3 * tm * n_pad * 4          # logits + p + layout temporaries
              + n_pad * 4                   # running column sum-of-exp
              + (4 << 20))                  # slack
    vmem_limit = int(min(max(budget, 32 << 20), vmem_phys - (8 << 20)))

    out = pl.pallas_call(
        kernel,
        out_shape=jax.ShapeDtypeStruct((1, 1), jnp.float32),
        grid_spec=pltpu.PrefetchScalarGridSpec(
            num_scalar_prefetch=0,
            grid=(n_tiles,),
            in_specs=[
                pl.BlockSpec(memory_space=pltpu.MemorySpace.SMEM),  # logit_scale
                pl.BlockSpec((tm, d), lambda i: (i, 0)),            # image row tile
                txt_spec,                                           # all text (resident)
            ],
            out_specs=pl.BlockSpec(memory_space=pltpu.MemorySpace.SMEM),
            scratch_shapes=[
                pltpu.VMEM((1, n_pad), jnp.float32),  # running column sum-of-exp
                pltpu.SMEM((4,), jnp.float32),        # row-CE sums + running max
            ],
        ),
        compiler_params=pltpu.CompilerParams(
            dimension_semantics=("arbitrary",),       # grid axis carries reductions
            vmem_limit_bytes=vmem_limit,
        ),
    )(scale, img, txt)
    return out[0, 0]


def clip_loss_ref(image_features, text_features, logit_scale):
    # pure-JAX f32 reference (mirrors F.cross_entropy with labels = arange(N))
    logits_i = logit_scale * image_features @ text_features.T
    logits_t = logit_scale * text_features @ image_features.T
    n = logits_i.shape[0]
    labels = jnp.arange(n)

    def ce(logits):
        lse = jax.scipy.special.logsumexp(logits, axis=-1)
        correct = logits[jnp.arange(n), labels]
        return jnp.mean(lse - correct)

    return (ce(logits_i) + ce(logits_t)) / 2.0


if __name__ == "__main__":
    key = jax.random.PRNGKey(0)
    logit_scale = jnp.float32(14.285714)  # exp(1/0.07)-ish CLIP temperature

    # (N, D, tm): single tile / padded single tile / multi-tile / padded multi-tile
    cases = [(8, 32, None), (12, 32, None), (24, 32, 8), (20, 32, 8)]
    ok = True
    for (n, d, tm) in cases:
        k1, k2 = jax.random.split(jax.random.fold_in(key, n))
        img = jax.random.normal(k1, (n, d), dtype=jnp.float32)
        txt = jax.random.normal(k2, (n, d), dtype=jnp.float32)
        img = img / jnp.linalg.norm(img, axis=-1, keepdims=True)
        txt = txt / jnp.linalg.norm(txt, axis=-1, keepdims=True)

        loss = clip_loss(img, txt, logit_scale, tm=tm)
        jax.block_until_ready(loss)
        ref = clip_loss_ref(img, txt, logit_scale)
        # kernel uses a bf16 matmul path -> loosened tolerance vs the f32 ref
        if not jnp.allclose(loss, ref, rtol=5e-2, atol=5e-2):
            ok = False
            print("MISMATCH", n, d, tm, float(loss), float(ref))

    assert ok
    print("KERNEL_OK")
</pallas_src>

<mosaic_0001>
module attributes {stable_mosaic.version = 11 : i64} {
  func.func @_clip_loss_kernel(%arg0: i32, %arg1: memref<1xf32, #tpu.memory_space<smem>>, %arg2: memref<8x32xbf16, #tpu.memory_space<vmem>>, %arg3: memref<8x32xbf16, #tpu.memory_space<vmem>>, %arg4: memref<1x1xf32, #tpu.memory_space<smem>>, %arg5: memref<1x8xf32, #tpu.memory_space<vmem>>, %arg6: memref<4xf32, #tpu.memory_space<smem>>) attributes {dimension_semantics = [#tpu.dimension_semantics<arbitrary>], iteration_bounds = array<i64: 1>, scalar_prefetch = 0 : i64, scratch_operands = 2 : i64, tpu.core_type = #tpu.core_type<tc>, window_params = [{transform_indices = @transform_0, window_bounds = array<i64: 1>}, {transform_indices = @transform_1, window_bounds = array<i64: 8, 32>}, {pipeline_mode = #tpu.pipeline_mode<synchronous>, transform_indices = @transform_2, window_bounds = array<i64: 8, 32>}, {transform_indices = @transform_3, window_bounds = array<i64: 1, 1>}]} {
    %c0_i32 = arith.constant 0 : i32
    %0 = arith.cmpi eq, %arg0, %c0_i32 : i32
    %1 = arith.extui %0 : i1 to i32
    %c0_i32_0 = arith.constant 0 : i32
    %2 = arith.cmpi ne, %1, %c0_i32_0 : i32
    scf.if %2 {
      %cst_23 = arith.constant 0.000000e+00 : f32
      %61 = vector.broadcast %cst_23 : f32 to vector<1x8xf32>
      %c0_24 = arith.constant 0 : index
      %c0_25 = arith.constant 0 : index
      %62 = vector.load %arg5[%c0_24, %c0_25] : memref<1x8xf32, #tpu.memory_space<vmem>>, vector<1x8xf32>
      tpu.vector_store %arg5[%c0_24, %c0_25], %61 {strides = array<i32>} : memref<1x8xf32, #tpu.memory_space<vmem>>, vector<1x8xf32>,
      %cst_26 = arith.constant 0.000000e+00 : f32
      %c0_27 = arith.constant 0 : index
      %63 = memref.load %arg6[%c0_27] : memref<4xf32, #tpu.memory_space<smem>>
      memref.store %cst_26, %arg6[%c0_27] : memref<4xf32, #tpu.memory_space<smem>>
      %cst_28 = arith.constant 0.000000e+00 : f32
      %c1_29 = arith.constant 1 : index
      %64 = memref.load %arg6[%c1_29] : memref<4xf32, #tpu.memory_space<smem>>
      memref.store %cst_28, %arg6[%c1_29] : memref<4xf32, #tpu.memory_space<smem>>
      %cst_30 = arith.constant -1.000000e+30 : f32
      %c2_31 = arith.constant 2 : index
      %65 = memref.load %arg6[%c2_31] : memref<4xf32, #tpu.memory_space<smem>>
      memref.store %cst_30, %arg6[%c2_31] : memref<4xf32, #tpu.memory_space<smem>>
    } else {
    }
    %c0 = arith.constant 0 : index
    %3 = memref.load %arg1[%c0] : memref<1xf32, #tpu.memory_space<smem>>
    %c0_1 = arith.constant 0 : index
    %c0_2 = arith.constant 0 : index
    %4 = vector.load %arg2[%c0_1, %c0_2] : memref<8x32xbf16, #tpu.memory_space<vmem>>, vector<8x32xbf16>
    %5 = arith.extf %4 : vector<8x32xbf16> to vector<8x32xf32>
    %6 = vector.broadcast %3 : f32 to vector<8x32xf32>
    %7 = arith.mulf %5, %6 : vector<8x32xf32>
    %8 = arith.truncf %7 : vector<8x32xf32> to vector<8x32xbf16>
    %c0_3 = arith.constant 0 : index
    %c0_4 = arith.constant 0 : index
    %9 = vector.load %arg3[%c0_3, %c0_4] : memref<8x32xbf16, #tpu.memory_space<vmem>>, vector<8x32xbf16>
    %cst = arith.constant dense<0.000000e+00> : vector<8x8xf32>
    %10 = tpu.matmul %8, %9, %cst {dimension_numbers = #tpu.dot_dimension_numbers<[1], [1], [0], [0], [0, 0, 1, 0], [], []>} : vector<8x32xbf16>, vector<8x32xbf16>, vector<8x8xf32> -> vector<8x8xf32>
    %c8_i32 = arith.constant 8 : i32
    %11 = arith.muli %arg0, %c8_i32 : i32
    %12 = tpu.assume_multiple %11, 8 : i32
    %13 = arith.index_cast %12 : i32 to index
    %c0_5 = arith.constant 0 : index
    %14 = vector.load %arg3[%13, %c0_5] : memref<8x32xbf16, #tpu.memory_space<vmem>>, vector<8x32xbf16>
    %15 = arith.extf %8 : vector<8x32xbf16> to vector<8x32xf32>
    %16 = arith.extf %14 : vector<8x32xbf16> to vector<8x32xf32>
    %17 = arith.mulf %15, %16 : vector<8x32xf32>
    %cst_6 = arith.constant dense<0.000000e+00> : vector<8xf32>
    %18 = vector.multi_reduction <add>, %17, %cst_6 [1] : vector<8x32xf32> to vector<8xf32>
    %19 = vector.shape_cast %18 : vector<8xf32> to vector<8x1xf32>
    %c2 = arith.constant 2 : index
    %20 = memref.load %arg6[%c2] : memref<4xf32, #tpu.memory_space<smem>>
    %21 = vector.shape_cast %10 : vector<8x8xf32> to vector<1x8x8xf32>
    %cst_7 = arith.constant dense<0xFF800000> : vector<1xf32>
    %22 = vector.multi_reduction <maximumf>, %21, %cst_7 [1, 2] : vector<1x8x8xf32> to vector<1xf32>
    %23 = vector.shape_cast %22 : vector<1xf32> to vector<1x1x1xf32>
    %24 = vector.extract %23[0, 0, 0] : f32 from vector<1x1x1xf32>
    %25 = arith.maximumf %20, %24 : f32
    %c2_8 = arith.constant 2 : index
    %26 = memref.load %arg6[%c2_8] : memref<4xf32, #tpu.memory_space<smem>>
    memref.store %25, %arg6[%c2_8] : memref<4xf32, #tpu.memory_space<smem>>
    %27 = vector.broadcast %25 : f32 to vector<8x8xf32>
    %28 = arith.subf %10, %27 : vector<8x8xf32>
    %29 = math.exp %28 : vector<8x8xf32>
    %cst_9 = arith.constant dense<0.000000e+00> : vector<8xf32>
    %30 = vector.multi_reduction <add>, %29, %cst_9 [1] : vector<8x8xf32> to vector<8xf32>
    %31 = vector.shape_cast %30 : vector<8xf32> to vector<8x1xf32>
    %32 = math.log %31 : vector<8x1xf32>
    %33 = vector.broadcast %25 : f32 to vector<8x1xf32>
    %34 = arith.addf %33, %32 : vector<8x1xf32>
    %c0_10 = arith.constant 0 : index
    %35 = memref.load %arg6[%c0_10] : memref<4xf32, #tpu.memory_space<smem>>
    %36 = arith.subf %34, %19 : vector<8x1xf32>
    %37 = vector.shape_cast %36 : vector<8x1xf32> to vector<1x8x1xf32>
    %cst_11 = arith.constant dense<0.000000e+00> : vector<1xf32>
    %38 = vector.multi_reduction <add>, %37, %cst_11 [1, 2] : vector<1x8x1xf32> to vector<1xf32>
    %39 = vector.shape_cast %38 : vector<1xf32> to vector<1x1x1xf32>
    %40 = vector.extract %39[0, 0, 0] : f32 from vector<1x1x1xf32>
    %41 = arith.addf %35, %40 : f32
    %c0_12 = arith.constant 0 : index
    %42 = memref.load %arg6[%c0_12] : memref<4xf32, #tpu.memory_space<smem>>
    memref.store %41, %arg6[%c0_12] : memref<4xf32, #tpu.memory_space<smem>>
    %c1 = arith.constant 1 : index
    %43 = memref.load %arg6[%c1] : memref<4xf32, #tpu.memory_space<smem>>
    %44 = vector.shape_cast %19 : vector<8x1xf32> to vector<1x8x1xf32>
    %cst_13 = arith.constant dense<0.000000e+00> : vector<1xf32>
    %45 = vector.multi_reduction <add>, %44, %cst_13 [1, 2] : vector<1x8x1xf32> to vector<1xf32>
    %46 = vector.shape_cast %45 : vector<1xf32> to vector<1x1x1xf32>
    %47 = vector.extract %46[0, 0, 0] : f32 from vector<1x1x1xf32>
    %48 = arith.addf %43, %47 : f32
    %c1_14 = arith.constant 1 : index
    %49 = memref.load %arg6[%c1_14] : memref<4xf32, #tpu.memory_space<smem>>
    memref.store %48, %arg6[%c1_14] : memref<4xf32, #tpu.memory_space<smem>>
    %50 = arith.cmpf ogt, %25, %20 : f32
    %51 = arith.extui %50 : i1 to i32
    %c0_i32_15 = arith.constant 0 : i32
    %52 = arith.cmpi ne, %51, %c0_i32_15 : i32
    scf.if %52 {
      %c0_23 = arith.constant 0 : index
      %c0_24 = arith.constant 0 : index
      %61 = vector.load %arg5[%c0_23, %c0_24] : memref<1x8xf32, #tpu.memory_space<vmem>>, vector<1x8xf32>
      %62 = arith.subf %20, %25 : f32
      %63 = math.exp %62 : f32
      %64 = vector.broadcast %63 : f32 to vector<1x8xf32>
      %65 = arith.mulf %61, %64 : vector<1x8xf32>
      %c0_25 = arith.constant 0 : index
      %c0_26 = arith.constant 0 : index
      %66 = vector.load %arg5[%c0_25, %c0_26] : memref<1x8xf32, #tpu.memory_space<vmem>>, vector<1x8xf32>
      tpu.vector_store %arg5[%c0_25, %c0_26], %65 {strides = array<i32>} : memref<1x8xf32, #tpu.memory_space<vmem>>, vector<1x8xf32>,
    } else {
    }
    %c0_16 = arith.constant 0 : index
    %c0_17 = arith.constant 0 : index
    %53 = vector.load %arg5[%c0_16, %c0_17] : memref<1x8xf32, #tpu.memory_space<vmem>>, vector<1x8xf32>
    %cst_18 = arith.constant dense<0.000000e+00> : vector<8xf32>
    %54 = vector.multi_reduction <add>, %29, %cst_18 [0] : vector<8x8xf32> to vector<8xf32>
    %55 = vector.shape_cast %54 : vector<8xf32> to vector<1x8xf32>
    %56 = arith.addf %53, %55 : vector<1x8xf32>
    %c0_19 = arith.constant 0 : index
    %c0_20 = arith.constant 0 : index
    %57 = vector.load %arg5[%c0_19, %c0_20] : memref<1x8xf32, #tpu.memory_space<vmem>>, vector<1x8xf32>
    tpu.vector_store %arg5[%c0_19, %c0_20], %56 {strides = array<i32>} : memref<1x8xf32, #tpu.memory_space<vmem>>, vector<1x8xf32>,
    %c0_i32_21 = arith.constant 0 : i32
    %58 = arith.cmpi eq, %arg0, %c0_i32_21 : i32
    %59 = arith.extui %58 : i1 to i32
    %c0_i32_22 = arith.constant 0 : i32
    %60 = arith.cmpi ne, %59, %c0_i32_22 : i32
    scf.if %60 {
      %c2_23 = arith.constant 2 : index
      %61 = memref.load %arg6[%c2_23] : memref<4xf32, #tpu.memory_space<smem>>
      %c0_24 = arith.constant 0 : index
      %c0_25 = arith.constant 0 : index
      %62 = vector.load %arg5[%c0_24, %c0_25] : memref<1x8xf32, #tpu.memory_space<vmem>>, vector<1x8xf32>
      %63 = math.log %62 : vector<1x8xf32>
      %64 = vector.broadcast %61 : f32 to vector<1x8xf32>
      %65 = arith.addf %64, %63 : vector<1x8xf32>
      %66 = vector.shape_cast %65 : vector<1x8xf32> to vector<1x1x8xf32>
      %cst_26 = arith.constant dense<0.000000e+00> : vector<1xf32>
      %67 = vector.multi_reduction <add>, %66, %cst_26 [1, 2] : vector<1x1x8xf32> to vector<1xf32>
      %68 = vector.shape_cast %67 : vector<1xf32> to vector<1x1x1xf32>
      %69 = vector.extract %68[0, 0, 0] : f32 from vector<1x1x1xf32>
      %c0_27 = arith.constant 0 : index
      %70 = memref.load %arg6[%c0_27] : memref<4xf32, #tpu.memory_space<smem>>
      %c1_28 = arith.constant 1 : index
      %71 = memref.load %arg6[%c1_28] : memref<4xf32, #tpu.memory_space<smem>>
      %72 = arith.subf %69, %71 : f32
      %73 = arith.addf %70, %72 : f32
      %cst_29 = arith.constant 6.250000e-02 : f32
      %74 = arith.mulf %73, %cst_29 : f32
      %c0_30 = arith.constant 0 : index
      %c0_31 = arith.constant 0 : index
      %75 = memref.load %arg4[%c0_30, %c0_31] : memref<1x1xf32, #tpu.memory_space<smem>>
      memref.store %74, %arg4[%c0_30, %c0_31] : memref<1x1xf32, #tpu.memory_space<smem>>
    } else {
    }
    return
  }
  func.func @transform_0(%arg0: i32) -> i32 {
    %c0_i32 = arith.constant 0 : i32
    %c0_i32_0 = arith.constant 0 : i32
    return %c0_i32 : i32
  }
  func.func @transform_1(%arg0: i32) -> (i32, i32) {
    %c0_i32 = arith.constant 0 : i32
    %c0_i32_0 = arith.constant 0 : i32
    return %arg0, %c0_i32 : i32, i32
  }
  func.func @transform_2(%arg0: i32) -> (i32, i32) {
    %c0_i32 = arith.constant 0 : i32
    %c0_i32_0 = arith.constant 0 : i32
    %c0_i32_1 = arith.constant 0 : i32
    return %c0_i32, %c0_i32_0 : i32, i32
  }
  func.func @transform_3(%arg0: i32) -> (i32, i32) {
    %c0_i32 = arith.constant 0 : i32
    %c0_i32_0 = arith.constant 0 : i32
    %c0_i32_1 = arith.constant 0 : i32
    return %c0_i32, %c0_i32_0 : i32, i32
  }
}

</mosaic_0001>

<llo_original>
// kernel: tpu_custom_call.1
$region0: #{tpu_custom_call.1}
  #allocation0 [shape = 'u32[]', space=smem, size = 0x4, offset = 0x4, fixed_abs, tag = 'smem constant byte address 0x4 - core index']
  #allocation1 [shape = 'u32[144,128]{1,0:T(1,128)}', space=vmem, size = 0x12000, scoped, tag = 'internal scratch']
  #allocation2 [shape = 'f32[1,8]{1,0:T(1,128)}', space=vmem, size = 0x200, scoped, tag = 'scratch operand']
  #allocation3 [shape = 'f32[4]{0:T(128)}', space=smem, size = 0x200, scoped, tag = 'scratch operand']
  #allocation4 [shape = 'f32[1]{0:T(128)S(6)}', space=smem, size = 0x200, scoped, tag = 'scoped memory for tpu_custom_call.1']
  %s0 = inlined_call_operand.<no memory space> [shape: f32[1], index: 0, kind: input, shape index: {}]
  %s1 = inlined_call_operand.hbm [shape: bf16[8,32], index: 1, kind: input, shape index: {}]
  %s2 = inlined_call_operand.vmem [shape: bf16[8,32], index: 2, kind: input, shape index: {}]
  %s3 = inlined_call_operand.hbm [shape: f32[1,1], index: 3, kind: output, shape index: {}]
  %s4 = sld [smem:[#allocation0]]
  $region38: #{tpu_custom_call.1} parent=0
    _
  %s6 = ssub.s32 1, %s4
  %s7 = scalar_select 0, %s6, %s4
  %8 = sst [smem:[#allocation4]] %s0
  $region1: #{tpu_custom_call.1} parent=0
    #allocation5 [shape = 'u8[2048]{0}', space=vmem, size = 0x800, scoped, tag = 'input window, operand 1, single buffered']
    #allocation6 [shape = 's32[1]{0}', space=sflag, size = 0x4, scoped, tag = 'scoped memory for tpu_custom_call.1']
    #allocation7 [shape = 's32[1]{0}', space=sflag, size = 0x4, scoped, tag = 'scoped memory for tpu_custom_call.1']
    #allocation8 [shape = 'u8[512]{0}', space=smem, size = 0x200, scoped, tag = 'output window, operand 0, single buffered']
    %9 = vsyncpa [#allocation6], 0
    %10 = vsyncpa [#allocation7], 0
    // Predicated region
    $region2: #{tpu_custom_call.1} parent=1 // pred_check
      _
    $region3: #{tpu_custom_call.1} parent=1 // pred_check_branch
      %12 = sbr.rel (0) target = $region5
    $region4: #{tpu_custom_call.1} parent=1 // pred_region
      _
    $region5: #{tpu_custom_call.1} parent=1 // pred_fallthru
      _
    // Predicated region
    $region6: #{tpu_custom_call.1} parent=1 // pred_check
      _
    $region7: #{tpu_custom_call.1} parent=1 // pred_check_branch
      %14 = sbr.rel (0) target = $region9
    $region8: #{tpu_custom_call.1} parent=1 // pred_region
      %s16 = ssub.s32 64, 64
      %17 = vsyncadd [#allocation6], %s16
      %s19 = sshll.u32 [#allocation5], 4
      %s20 = int_to_ptr.vmem [resolvable:$true] %s19
      %22 = dma.hbm_to_vmem [thread:$0]  %s1, 64, %s20, [#allocation6]
    $region9: #{tpu_custom_call.1} parent=1 // pred_fallthru
      _
    // Predicated region
    $region10: #{tpu_custom_call.1} parent=1 // pred_check
      _
    $region11: #{tpu_custom_call.1} parent=1 // pred_check_branch
      %24 = sbr.rel (0) target = $region13
    $region12: #{tpu_custom_call.1} parent=1 // pred_region
      _
    $region13: #{tpu_custom_call.1} parent=1 // pred_fallthru
      _
    // Predicated region
    $region14: #{tpu_custom_call.1} parent=1 // pred_check
      _
    $region15: #{tpu_custom_call.1} parent=1 // pred_check_branch
      %26 = sbr.rel (0) target = $region17
    $region16: #{tpu_custom_call.1} parent=1 // pred_region
      %27 = dma.done [#allocation6], 64
    $region17: #{tpu_custom_call.1} parent=1 // pred_fallthru
      _
    %p29 = scmp.eq.s32.totalorder 0, 0
    // Predicated region
    $region18: #{tpu_custom_call.1} parent=1 // pred_check
      %p30 = pneg %p29
    $region19: #{tpu_custom_call.1} parent=1 // pred_check_branch
      %32 = sbr.rel (%p30) target = $region21
    $region20: #{tpu_custom_call.1} parent=1 // pred_region
      %vm33 = vcmask 57344
      %34 = vst.msk [vmem:[#allocation2] sm:$0x1] %vm33, 0.0
      %s35 = scalar_lea.smem [#allocation3], 0
      %36 = sst [smem:[%s35]] 0.0
      %s37 = scalar_lea.smem [#allocation3], 1
      %38 = sst [smem:[%s37]] 0.0
      %s39 = scalar_lea.smem [#allocation3], 2
      %40 = sst [smem:[%s39]] -1e+30
    $region21: #{tpu_custom_call.1} parent=1 // pred_fallthru
      _
    %s41 = sld [smem:[#allocation4]]
    %v42 = vld [vmem:[#allocation5] sm:$0xf]
    %v43 = vunpack.c.l.bf16 %v42
    %v44 = vstv %s41
    %v45 = vmul.f32 %v43, %v44
    %v46 = vpack.c.bf16 %v45, %v45
    %v47 = vld [vmem:[%s2] sm:$0xf]
    %vm48 = vcmask 261120
    %v50 = vsel %vm48, %v46, 0
    %v53 = vsel %vm48, %v47, 0
    %55 = vmatprep.subr.bf16.mxu0 0
    %56 = vmatpush1.bf16.xpose.msra.mxu0 %v53
    %57 = vmatprep.subr.bf16.mxu0 0
    %58 = vmatpush1.bf16.xpose.msra.mxu0 0
    %59 = vmatprep.subr.bf16.mxu0 0
    %60 = vmatpush1.bf16.xpose.msra.mxu0 0
    %61 = vmatprep.subr.bf16.mxu0 0
    %62 = vmatpush1.bf16.xpose.msra.mxu0 0
    %63 = vmatprep.subr.bf16.mxu0 0
    %64 = vmatpush1.bf16.xpose.msra.mxu0 0
    %65 = vmatprep.subr.bf16.mxu0 0
    %66 = vmatpush1.bf16.xpose.msra.mxu0 0
    %67 = vmatprep.subr.bf16.mxu0 0
    %68 = vmatpush1.bf16.xpose.msra.mxu0 0
    %69 = vmatprep.subr.bf16.mxu0 0
    %70 = vmatpush1.bf16.xpose.msra.mxu0 0
    %71 = vmatprep.subr.bf16.mxu0 0
    %72 = vmatpush1.bf16.xpose.msra.mxu0 0
    %73 = vmatprep.subr.bf16.mxu0 0
    %74 = vmatpush1.bf16.xpose.msra.mxu0 0
    %75 = vmatprep.subr.bf16.mxu0 0
    %76 = vmatpush1.bf16.xpose.msra.mxu0 0
    %77 = vmatprep.subr.bf16.mxu0 0
    %78 = vmatpush1.bf16.xpose.msra.mxu0 0
    %79 = vmatprep.subr.bf16.mxu0 0
    %80 = vmatpush1.bf16.xpose.msra.mxu0 0
    %81 = vmatprep.subr.bf16.mxu0 0
    %82 = vmatpush1.bf16.xpose.msra.mxu0 0
    %83 = vmatprep.subr.bf16.mxu0 0
    %84 = vmatpush1.bf16.xpose.msra.mxu0 0
    %85 = vmatprep.subr.bf16.mxu0 0
    %86 = vmatpush1.bf16.xpose.msra.mxu0 0
    %87 = vmatprep.mubr.bf16.mxu0 0
    %88 = vmatmul.mubr.bf16.gmra.mrb[0].mxu0 %v50
    %v89 = vpop.f32.mrb[0].mxu0
    %v90 = vadd.f32 0.0, %v89
    %v91 = vpop.f32.mrb[0].mxu0
    %v92 = vpop.f32.mrb[0].mxu0
    %v93 = vpop.f32.mrb[0].mxu0
    %94 = vdwg.mxu0
    %s95 = smul.u32 0, 8
    %s96 = sshra.s32 %s95, 3
    %s97 = sand.u32 %s95, 7
    %s98 = smul.addr %s96, 4
    %s99 = scalar_lea.vmem %s2, %s98
    %v100 = vld [vmem:[%s99] sm:$0xf]
    %v101 = vunpack.c.l.bf16 %v46
    %v102 = vunpack.c.l.bf16 %v100
    %v103 = vmul.f32 %v101, %v102
    %v104 = vsel %vm48, %v103, 0.0
    %105 = vadd.xlane.f32.xlu0 %v104
    %v106 = vpop.xlane.xlu0 %105
    %s107 = sld [smem:[#allocation3 + $0x2]]
    %vm108 = vcmask 64512
    %v109 = vsel %vm108, %v90, -inf
    %110 = vmax.xlane.f32.xlu0 %v109
    %v111 = vpop.xlane.xlu0 %110
    %v112 = vrot.slane %v111, 4
    %v113 = vmax.f32 %v111, %v112
    %v114 = vrot.slane %v113, 2
    %v115 = vmax.f32 %v113, %v114
    %v116 = vrot.slane %v115, 1
    %v117 = vmax.f32 %v115, %v116
    %s118 = vtos %v117
    %s119 = smax.f32 %s107, %s118
    %s120 = scalar_lea.smem [#allocation3], 2
    %121 = sst [smem:[%s120]] %s119
    %v122 = vstv %s119
    %v123 = vsub.f32 %v90, %v122
    %v124 = vmul.f32 %v123, 1.442695
    %v125 = vpow.pop %v124
    %v126 = vsel %vm108, %v125, 0.0
    %127 = vadd.xlane.f32.xlu0 %v126
    %v128 = vpop.xlane.xlu0 %127
    %v129 = vlog2.pop %v128
    %v130 = vmul.f32 %v129, 0.6931472
    %v131 = vadd.f32 %v122, %v130
    %s132 = sld [smem:[#allocation3]]
    %v133 = vsub.f32 %v131, %v106
    %vm134 = vcmask 7168
    %v135 = vsel %vm134, %v133, 0.0
    %136 = vadd.xlane.f32.xlu0 %v135
    %v137 = vpop.xlane.xlu0 %136
    %v138 = vrot.slane %v137, 4
    %v139 = vadd.f32 %v137, %v138
    %v140 = vrot.slane %v139, 2
    %v141 = vadd.f32 %v139, %v140
    %v142 = vrot.slane %v141, 1
    %v143 = vadd.f32 %v141, %v142
    %s144 = vtos %v143
    %s145 = sadd.f32 %s132, %s144
    %s146 = scalar_lea.smem [#allocation3], 0
    %147 = sst [smem:[%s146]] %s145
    %s148 = sld [smem:[#allocation3 + $0x1]]
    %v149 = vsel %vm134, %v106, 0.0
    %150 = vadd.xlane.f32.xlu0 %v149
    %v151 = vpop.xlane.xlu0 %150
    %v152 = vrot.slane %v151, 4
    %v153 = vadd.f32 %v151, %v152
    %v154 = vrot.slane %v153, 2
    %v155 = vadd.f32 %v153, %v154
    %v156 = vrot.slane %v155, 1
    %v157 = vadd.f32 %v155, %v156
    %s158 = vtos %v157
    %s159 = sadd.f32 %s148, %s158
    %s160 = scalar_lea.smem [#allocation3], 1
    %161 = sst [smem:[%s160]] %s159
    %p162 = scmp.gt.f32.partialorder %s119, %s107
    // Predicated region
    $region22: #{tpu_custom_call.1} parent=1 // pred_check
      %p163 = pneg %p162
    $region23: #{tpu_custom_call.1} parent=1 // pred_check_branch
      %165 = sbr.rel (%p163) target = $region25
    $region24: #{tpu_custom_call.1} parent=1 // pred_region
      %v166 = vld [vmem:[#allocation2] sm:$0x1]
      %s167 = ssub.f32 %s107, %s119
      %v168 = vstv %s167
      %v169 = vmul.f32 %v168, 1.442695
      %v170 = vpow.pop %v169
      %s171 = vtos %v170
      %v172 = vstv %s171
      %v173 = vmul.f32 %v166, %v172
      %vm174 = vcmask 57344
      %175 = vst.msk [vmem:[#allocation2] sm:$0x1] %vm174, %v173
    $region25: #{tpu_custom_call.1} parent=1 // pred_fallthru
      _
    %v176 = vld [vmem:[#allocation2] sm:$0x1]
    %v177 = vrot.slane %v126, 4
    %v178 = vadd.f32 %v126, %v177
    %v179 = vrot.slane %v178, 2
    %v180 = vadd.f32 %v178, %v179
    %v181 = vrot.slane %v180, 1
    %v182 = vadd.f32 %v180, %v181
    %v183 = vadd.f32 %v176, %v182
    %vm184 = vcmask 57344
    %185 = vst.msk [vmem:[#allocation2] sm:$0x1] %vm184, %v183
    // Predicated region
    $region26: #{tpu_custom_call.1} parent=1 // pred_check
      %p186 = pneg %p29
    $region27: #{tpu_custom_call.1} parent=1 // pred_check_branch
      %188 = sbr.rel (%p186) target = $region29
    $region28: #{tpu_custom_call.1} parent=1 // pred_region
      %s189 = sld [smem:[#allocation3 + $0x2]]
      %v190 = vld [vmem:[#allocation2] sm:$0x1]
      %v191 = vlog2.pop %v190
      %v192 = vmul.f32 %v191, 0.6931472
      %v193 = vstv %s189
      %v194 = vadd.f32 %v193, %v192
      %v195 = vsel %vm184, %v194, 0.0
      %196 = vadd.xlane.f32.xlu0 %v195
      %v197 = vpop.xlane.xlu0 %196
      %v198 = vrot.slane %v197, 4
      %v199 = vadd.f32 %v197, %v198
      %v200 = vrot.slane %v199, 2
      %v201 = vadd.f32 %v199, %v200
      %v202 = vrot.slane %v201, 1
      %v203 = vadd.f32 %v201, %v202
      %s204 = vtos %v203
      %s205 = sld [smem:[#allocation3]]
      %s206 = sld [smem:[#allocation3 + $0x1]]
      %s207 = ssub.f32 %s204, %s206
      %s208 = sadd.f32 %s205, %s207
      %s209 = smul.f32 %s208, 0.0625
      %s210 = scalar_lea.smem [#allocation8], 0
      %211 = sst [smem:[%s210]] %s209
    $region29: #{tpu_custom_call.1} parent=1 // pred_fallthru
      _
    // Predicated region
    $region30: #{tpu_custom_call.1} parent=1 // pred_check
      _
    $region31: #{tpu_custom_call.1} parent=1 // pred_check_branch
      %213 = sbr.rel (0) target = $region33
    $region32: #{tpu_custom_call.1} parent=1 // pred_region
      %s215 = ssub.s32 16, 16
      %216 = vsyncadd [#allocation7], %s215
      %219 = dma.smem_to_hbm [#allocation8], 16, %s3, [#allocation7]
    $region33: #{tpu_custom_call.1} parent=1 // pred_fallthru
      _
    // Predicated region
    $region34: #{tpu_custom_call.1} parent=1 // pred_check
      _
    $region35: #{tpu_custom_call.1} parent=1 // pred_check_branch
      %221 = sbr.rel (0) target = $region37
    $region36: #{tpu_custom_call.1} parent=1 // pred_region
      %222 = dma.done [#allocation7], 16
    $region37: #{tpu_custom_call.1} parent=1 // pred_fallthru
      _
    %223 = sfence
    %224 = vsyncpa [#allocation6], 1
    %225 = vsyncpa [#allocation7], 1

</llo_original>
